<compile_context>
chip_gen: v7x
topology: tpu7x:2x2x1
jax: 0.10.0
libtpu: 0.0.40
codegen_flags: <defaults>
</compile_context>

<pallas_src>
import jax
import jax.numpy as jnp
from jax import lax
from jax.experimental import pallas as pl
from jax.experimental.pallas import tpu as pltpu

IN_F = 30                    # input features
HID_F = 40                   # no_of_features
OUT_F = 1
N_HIDDEN_APPLICATIONS = 10   # no_of_layers (same shared layer applied 10x)

IN_PAD = 32                  # 30 -> 32 (sublane multiple; keeps x narrow in HBM)
HID_PAD = 128                # 40 -> 128 lanes for MXU-friendly tiles
MAX_TB = 512                 # max batch tile: (512, 128) f32 = 256 KiB, tiny in VMEM


def _mlp_kernel(x_ref, w0_ref, b0_ref, w1_ref, b1_ref, w2_ref, b2_ref, o_ref):
    # Layer 0: Linear(30 -> 40) + ReLU.  x block (TB, 32) @ w0 (32, 128).
    h = jnp.dot(x_ref[...], w0_ref[...], preferred_element_type=jnp.float32)
    h = jnp.maximum(h + b0_ref[...], 0.0)

    # Hoist the shared hidden weights/bias out of the unrolled loop so the
    # 16-vreg W1 load happens once per tile, not 10 times.
    w1 = w1_ref[...]
    b1 = b1_ref[...]

    def body(_, h):
        z = jnp.dot(h, w1, preferred_element_type=jnp.float32)
        return jnp.maximum(z + b1, 0.0)

    h = lax.fori_loop(0, N_HIDDEN_APPLICATIONS, body, h, unroll=True)

    # Output layer: Linear(40 -> 1).  Done as elementwise-mul + cross-lane sum
    # (VPU + XLU) rather than an N=1 matmul; output block is (TB, 1).
    w2 = w2_ref[...]                                # (1, 128) row of output weights
    o_ref[...] = jnp.sum(h * w2, axis=-1, keepdims=True) + b2_ref[...]


def _pad2d(w, rows, cols):
    out = jnp.zeros((rows, cols), dtype=jnp.float32)
    return out.at[: w.shape[0], : w.shape[1]].set(w)


def _pad_bias(b, cols):
    out = jnp.zeros((1, cols), dtype=jnp.float32)
    return out.at[0, : b.shape[0]].set(b)


def neural_network_forward(x, params):
    """x: (B, 30) float32 -> logits (B, 1) float32."""
    w0, b0, w1, b1, w2, b2 = params
    B = x.shape[0]

    # Adaptive batch tile: as large as possible (up to MAX_TB) to amortize
    # per-step overhead, but never larger than the 8-padded batch itself.
    # For very large B the grid naturally has >= 2 steps (megacore on v7x).
    TB = min(MAX_TB, max(8, ((B + 7) // 8) * 8))
    B_pad = ((B + TB - 1) // TB) * TB

    # Weights stored transposed (in_f, out_f) so the kernel does x @ W
    # (equivalent to PyTorch x @ W.T).
    x_p = jnp.zeros((B_pad, IN_PAD), dtype=jnp.float32).at[:B, :IN_F].set(x)
    w0_p = _pad2d(w0.T, IN_PAD, HID_PAD)    # (30, 40) -> (32, 128)
    w1_p = _pad2d(w1.T, HID_PAD, HID_PAD)   # (40, 40) -> (128, 128)
    w2_p = _pad2d(w2, 1, HID_PAD)           # (1, 40)  -> (1, 128)  row vector
    b0_p = _pad_bias(b0, HID_PAD)
    b1_p = _pad_bias(b1, HID_PAD)
    b2_p = jnp.reshape(b2.astype(jnp.float32), (1, 1))

    grid = (B_pad // TB,)

    out_p = pl.pallas_call(
        _mlp_kernel,
        out_shape=jax.ShapeDtypeStruct((B_pad, OUT_F), jnp.float32),
        grid_spec=pltpu.PrefetchScalarGridSpec(
            num_scalar_prefetch=0,
            grid=grid,
            in_specs=[
                pl.BlockSpec((TB, IN_PAD), lambda i: (i, 0)),        # x tile
                pl.BlockSpec((IN_PAD, HID_PAD), lambda i: (0, 0)),   # W0
                pl.BlockSpec((1, HID_PAD), lambda i: (0, 0)),        # b0
                pl.BlockSpec((HID_PAD, HID_PAD), lambda i: (0, 0)),  # shared W1
                pl.BlockSpec((1, HID_PAD), lambda i: (0, 0)),        # shared b1
                pl.BlockSpec((1, HID_PAD), lambda i: (0, 0)),        # W2 (row)
                pl.BlockSpec((1, 1), lambda i: (0, 0)),              # b2
            ],
            out_specs=pl.BlockSpec((TB, OUT_F), lambda i: (i, 0)),
        ),
        compiler_params=pltpu.CompilerParams(
            dimension_semantics=("parallel",)),
    )(x_p, w0_p, b0_p, w1_p, b1_p, w2_p, b2_p)

    return out_p[:B, :OUT_F]


def init_params(key):
    """Deterministic init mimicking PyTorch's U(-1/sqrt(fan_in), 1/sqrt(fan_in))."""
    ks = jax.random.split(key, 6)

    def lin(kw, kb, fan_in, fan_out):
        bound = 1.0 / jnp.sqrt(fan_in)
        w = jax.random.uniform(kw, (fan_out, fan_in), jnp.float32, -bound, bound)
        b = jax.random.uniform(kb, (fan_out,), jnp.float32, -bound, bound)
        return w, b

    w0, b0 = lin(ks[0], ks[1], IN_F, HID_F)    # Linear(30, 40)
    w1, b1 = lin(ks[2], ks[3], HID_F, HID_F)   # shared Linear(40, 40)
    w2, b2 = lin(ks[4], ks[5], HID_F, OUT_F)   # Linear(40, 1)
    return (w0, b0, w1, b1, w2, b2)


def _reference(x, params):
    w0, b0, w1, b1, w2, b2 = params
    h = jnp.maximum(x @ w0.T + b0, 0.0)
    for _ in range(N_HIDDEN_APPLICATIONS):
        h = jnp.maximum(h @ w1.T + b1, 0.0)
    return h @ w2.T + b2


if __name__ == "__main__":
    key = jax.random.PRNGKey(0)
    kx, kp = jax.random.split(key)

    B = 16
    x = jax.random.normal(kx, (B, IN_F), dtype=jnp.float32)
    params = init_params(kp)

    out = neural_network_forward(x, params)
    out = jax.block_until_ready(out)

    ref = _reference(x, params)
    assert out.shape == (B, OUT_F), out.shape
    assert jnp.allclose(out, ref, atol=1e-4, rtol=1e-4), (out, ref)

    print("KERNEL_OK")
</pallas_src>

<mosaic_0001>
module attributes {stable_mosaic.version = 11 : i64} {
  func.func @_mlp_kernel(%arg0: i32, %arg1: memref<16x32xf32, #tpu.memory_space<vmem>>, %arg2: memref<32x128xf32, #tpu.memory_space<vmem>>, %arg3: memref<1x128xf32, #tpu.memory_space<vmem>>, %arg4: memref<128x128xf32, #tpu.memory_space<vmem>>, %arg5: memref<1x128xf32, #tpu.memory_space<vmem>>, %arg6: memref<1x128xf32, #tpu.memory_space<vmem>>, %arg7: memref<1x1xf32, #tpu.memory_space<vmem>>, %arg8: memref<16x1xf32, #tpu.memory_space<vmem>>) attributes {dimension_semantics = [#tpu.dimension_semantics<parallel>], iteration_bounds = array<i64: 1>, scalar_prefetch = 0 : i64, scratch_operands = 0 : i64, tpu.core_type = #tpu.core_type<tc>, window_params = [{transform_indices = @transform_0, window_bounds = array<i64: 16, 32>}, {pipeline_mode = #tpu.pipeline_mode<synchronous>, transform_indices = @transform_1, window_bounds = array<i64: 32, 128>}, {pipeline_mode = #tpu.pipeline_mode<synchronous>, transform_indices = @transform_2, window_bounds = array<i64: 1, 128>}, {pipeline_mode = #tpu.pipeline_mode<synchronous>, transform_indices = @transform_3, window_bounds = array<i64: 128, 128>}, {pipeline_mode = #tpu.pipeline_mode<synchronous>, transform_indices = @transform_4, window_bounds = array<i64: 1, 128>}, {pipeline_mode = #tpu.pipeline_mode<synchronous>, transform_indices = @transform_5, window_bounds = array<i64: 1, 128>}, {pipeline_mode = #tpu.pipeline_mode<synchronous>, transform_indices = @transform_6, window_bounds = array<i64: 1, 1>}, {transform_indices = @transform_7, window_bounds = array<i64: 16, 1>}]} {
    %c0 = arith.constant 0 : index
    %c0_0 = arith.constant 0 : index
    %0 = vector.load %arg1[%c0, %c0_0] : memref<16x32xf32, #tpu.memory_space<vmem>>, vector<16x32xf32>
    %c0_1 = arith.constant 0 : index
    %c0_2 = arith.constant 0 : index
    %1 = vector.load %arg2[%c0_1, %c0_2] : memref<32x128xf32, #tpu.memory_space<vmem>>, vector<32x128xf32>
    %cst = arith.constant dense<0.000000e+00> : vector<16x128xf32>
    %2 = tpu.matmul %0, %1, %cst {dimension_numbers = #tpu.dot_dimension_numbers<[1], [0], [0], [1], [0, 0, 1, 1], [], []>} : vector<16x32xf32>, vector<32x128xf32>, vector<16x128xf32> -> vector<16x128xf32>
    %c0_3 = arith.constant 0 : index
    %c0_4 = arith.constant 0 : index
    %3 = vector.load %arg3[%c0_3, %c0_4] : memref<1x128xf32, #tpu.memory_space<vmem>>, vector<1x128xf32>
    %4 = vector.broadcast %3 : vector<1x128xf32> to vector<16x128xf32>
    %5 = arith.addf %2, %4 : vector<16x128xf32>
    %cst_5 = arith.constant 0.000000e+00 : f32
    %6 = vector.broadcast %cst_5 : f32 to vector<16x128xf32>
    %7 = arith.maximumf %5, %6 : vector<16x128xf32>
    %c0_6 = arith.constant 0 : index
    %c0_7 = arith.constant 0 : index
    %8 = vector.load %arg4[%c0_6, %c0_7] : memref<128x128xf32, #tpu.memory_space<vmem>>, vector<128x128xf32>
    %c0_8 = arith.constant 0 : index
    %c0_9 = arith.constant 0 : index
    %9 = vector.load %arg5[%c0_8, %c0_9] : memref<1x128xf32, #tpu.memory_space<vmem>>, vector<1x128xf32>
    %c0_i32 = arith.constant 0 : i32
    %cst_10 = arith.constant dense<0.000000e+00> : vector<16x128xf32>
    %10 = tpu.matmul %7, %8, %cst_10 {dimension_numbers = #tpu.dot_dimension_numbers<[1], [0], [0], [1], [0, 0, 1, 1], [], []>} : vector<16x128xf32>, vector<128x128xf32>, vector<16x128xf32> -> vector<16x128xf32>
    %11 = vector.broadcast %9 : vector<1x128xf32> to vector<16x128xf32>
    %12 = arith.addf %10, %11 : vector<16x128xf32>
    %cst_11 = arith.constant 0.000000e+00 : f32
    %13 = vector.broadcast %cst_11 : f32 to vector<16x128xf32>
    %14 = arith.maximumf %12, %13 : vector<16x128xf32>
    %c1_i32 = arith.constant 1 : i32
    %cst_12 = arith.constant dense<0.000000e+00> : vector<16x128xf32>
    %15 = tpu.matmul %14, %8, %cst_12 {dimension_numbers = #tpu.dot_dimension_numbers<[1], [0], [0], [1], [0, 0, 1, 1], [], []>} : vector<16x128xf32>, vector<128x128xf32>, vector<16x128xf32> -> vector<16x128xf32>
    %16 = vector.broadcast %9 : vector<1x128xf32> to vector<16x128xf32>
    %17 = arith.addf %15, %16 : vector<16x128xf32>
    %cst_13 = arith.constant 0.000000e+00 : f32
    %18 = vector.broadcast %cst_13 : f32 to vector<16x128xf32>
    %19 = arith.maximumf %17, %18 : vector<16x128xf32>
    %c2_i32 = arith.constant 2 : i32
    %cst_14 = arith.constant dense<0.000000e+00> : vector<16x128xf32>
    %20 = tpu.matmul %19, %8, %cst_14 {dimension_numbers = #tpu.dot_dimension_numbers<[1], [0], [0], [1], [0, 0, 1, 1], [], []>} : vector<16x128xf32>, vector<128x128xf32>, vector<16x128xf32> -> vector<16x128xf32>
    %21 = vector.broadcast %9 : vector<1x128xf32> to vector<16x128xf32>
    %22 = arith.addf %20, %21 : vector<16x128xf32>
    %cst_15 = arith.constant 0.000000e+00 : f32
    %23 = vector.broadcast %cst_15 : f32 to vector<16x128xf32>
    %24 = arith.maximumf %22, %23 : vector<16x128xf32>
    %c3_i32 = arith.constant 3 : i32
    %cst_16 = arith.constant dense<0.000000e+00> : vector<16x128xf32>
    %25 = tpu.matmul %24, %8, %cst_16 {dimension_numbers = #tpu.dot_dimension_numbers<[1], [0], [0], [1], [0, 0, 1, 1], [], []>} : vector<16x128xf32>, vector<128x128xf32>, vector<16x128xf32> -> vector<16x128xf32>
    %26 = vector.broadcast %9 : vector<1x128xf32> to vector<16x128xf32>
    %27 = arith.addf %25, %26 : vector<16x128xf32>
    %cst_17 = arith.constant 0.000000e+00 : f32
    %28 = vector.broadcast %cst_17 : f32 to vector<16x128xf32>
    %29 = arith.maximumf %27, %28 : vector<16x128xf32>
    %c4_i32 = arith.constant 4 : i32
    %cst_18 = arith.constant dense<0.000000e+00> : vector<16x128xf32>
    %30 = tpu.matmul %29, %8, %cst_18 {dimension_numbers = #tpu.dot_dimension_numbers<[1], [0], [0], [1], [0, 0, 1, 1], [], []>} : vector<16x128xf32>, vector<128x128xf32>, vector<16x128xf32> -> vector<16x128xf32>
    %31 = vector.broadcast %9 : vector<1x128xf32> to vector<16x128xf32>
    %32 = arith.addf %30, %31 : vector<16x128xf32>
    %cst_19 = arith.constant 0.000000e+00 : f32
    %33 = vector.broadcast %cst_19 : f32 to vector<16x128xf32>
    %34 = arith.maximumf %32, %33 : vector<16x128xf32>
    %c5_i32 = arith.constant 5 : i32
    %cst_20 = arith.constant dense<0.000000e+00> : vector<16x128xf32>
    %35 = tpu.matmul %34, %8, %cst_20 {dimension_numbers = #tpu.dot_dimension_numbers<[1], [0], [0], [1], [0, 0, 1, 1], [], []>} : vector<16x128xf32>, vector<128x128xf32>, vector<16x128xf32> -> vector<16x128xf32>
    %36 = vector.broadcast %9 : vector<1x128xf32> to vector<16x128xf32>
    %37 = arith.addf %35, %36 : vector<16x128xf32>
    %cst_21 = arith.constant 0.000000e+00 : f32
    %38 = vector.broadcast %cst_21 : f32 to vector<16x128xf32>
    %39 = arith.maximumf %37, %38 : vector<16x128xf32>
    %c6_i32 = arith.constant 6 : i32
    %cst_22 = arith.constant dense<0.000000e+00> : vector<16x128xf32>
    %40 = tpu.matmul %39, %8, %cst_22 {dimension_numbers = #tpu.dot_dimension_numbers<[1], [0], [0], [1], [0, 0, 1, 1], [], []>} : vector<16x128xf32>, vector<128x128xf32>, vector<16x128xf32> -> vector<16x128xf32>
    %41 = vector.broadcast %9 : vector<1x128xf32> to vector<16x128xf32>
    %42 = arith.addf %40, %41 : vector<16x128xf32>
    %cst_23 = arith.constant 0.000000e+00 : f32
    %43 = vector.broadcast %cst_23 : f32 to vector<16x128xf32>
    %44 = arith.maximumf %42, %43 : vector<16x128xf32>
    %c7_i32 = arith.constant 7 : i32
    %cst_24 = arith.constant dense<0.000000e+00> : vector<16x128xf32>
    %45 = tpu.matmul %44, %8, %cst_24 {dimension_numbers = #tpu.dot_dimension_numbers<[1], [0], [0], [1], [0, 0, 1, 1], [], []>} : vector<16x128xf32>, vector<128x128xf32>, vector<16x128xf32> -> vector<16x128xf32>
    %46 = vector.broadcast %9 : vector<1x128xf32> to vector<16x128xf32>
    %47 = arith.addf %45, %46 : vector<16x128xf32>
    %cst_25 = arith.constant 0.000000e+00 : f32
    %48 = vector.broadcast %cst_25 : f32 to vector<16x128xf32>
    %49 = arith.maximumf %47, %48 : vector<16x128xf32>
    %c8_i32 = arith.constant 8 : i32
    %cst_26 = arith.constant dense<0.000000e+00> : vector<16x128xf32>
    %50 = tpu.matmul %49, %8, %cst_26 {dimension_numbers = #tpu.dot_dimension_numbers<[1], [0], [0], [1], [0, 0, 1, 1], [], []>} : vector<16x128xf32>, vector<128x128xf32>, vector<16x128xf32> -> vector<16x128xf32>
    %51 = vector.broadcast %9 : vector<1x128xf32> to vector<16x128xf32>
    %52 = arith.addf %50, %51 : vector<16x128xf32>
    %cst_27 = arith.constant 0.000000e+00 : f32
    %53 = vector.broadcast %cst_27 : f32 to vector<16x128xf32>
    %54 = arith.maximumf %52, %53 : vector<16x128xf32>
    %c9_i32 = arith.constant 9 : i32
    %cst_28 = arith.constant dense<0.000000e+00> : vector<16x128xf32>
    %55 = tpu.matmul %54, %8, %cst_28 {dimension_numbers = #tpu.dot_dimension_numbers<[1], [0], [0], [1], [0, 0, 1, 1], [], []>} : vector<16x128xf32>, vector<128x128xf32>, vector<16x128xf32> -> vector<16x128xf32>
    %56 = vector.broadcast %9 : vector<1x128xf32> to vector<16x128xf32>
    %57 = arith.addf %55, %56 : vector<16x128xf32>
    %cst_29 = arith.constant 0.000000e+00 : f32
    %58 = vector.broadcast %cst_29 : f32 to vector<16x128xf32>
    %59 = arith.maximumf %57, %58 : vector<16x128xf32>
    %c0_30 = arith.constant 0 : index
    %c0_31 = arith.constant 0 : index
    %60 = vector.load %arg6[%c0_30, %c0_31] : memref<1x128xf32, #tpu.memory_space<vmem>>, vector<1x128xf32>
    %61 = vector.broadcast %60 : vector<1x128xf32> to vector<16x128xf32>
    %62 = arith.mulf %59, %61 : vector<16x128xf32>
    %cst_32 = arith.constant dense<0.000000e+00> : vector<16xf32>
    %63 = vector.multi_reduction <add>, %62, %cst_32 [1] : vector<16x128xf32> to vector<16xf32>
    %64 = vector.shape_cast %63 : vector<16xf32> to vector<16x1xf32>
    %c0_33 = arith.constant 0 : index
    %c0_34 = arith.constant 0 : index
    %65 = vector.load %arg7[%c0_33, %c0_34] : memref<1x1xf32, #tpu.memory_space<vmem>>, vector<1x1xf32>
    %66 = vector.broadcast %65 : vector<1x1xf32> to vector<16x1xf32>
    %67 = arith.addf %64, %66 : vector<16x1xf32>
    %c0_35 = arith.constant 0 : index
    %c0_36 = arith.constant 0 : index
    %68 = vector.load %arg8[%c0_35, %c0_36] : memref<16x1xf32, #tpu.memory_space<vmem>>, vector<16x1xf32>
    tpu.vector_store %arg8[%c0_35, %c0_36], %67 {strides = array<i32>} : memref<16x1xf32, #tpu.memory_space<vmem>>, vector<16x1xf32>,
    return
  }
  func.func @transform_0(%arg0: i32) -> (i32, i32) {
    %c0_i32 = arith.constant 0 : i32
    %c0_i32_0 = arith.constant 0 : i32
    return %arg0, %c0_i32 : i32, i32
  }
  func.func @transform_1(%arg0: i32) -> (i32, i32) {
    %c0_i32 = arith.constant 0 : i32
    %c0_i32_0 = arith.constant 0 : i32
    %c0_i32_1 = arith.constant 0 : i32
    return %c0_i32, %c0_i32_0 : i32, i32
  }
  func.func @transform_2(%arg0: i32) -> (i32, i32) {
    %c0_i32 = arith.constant 0 : i32
    %c0_i32_0 = arith.constant 0 : i32
    %c0_i32_1 = arith.constant 0 : i32
    return %c0_i32, %c0_i32_0 : i32, i32
  }
  func.func @transform_3(%arg0: i32) -> (i32, i32) {
    %c0_i32 = arith.constant 0 : i32
    %c0_i32_0 = arith.constant 0 : i32
    %c0_i32_1 = arith.constant 0 : i32
    return %c0_i32, %c0_i32_0 : i32, i32
  }
  func.func @transform_4(%arg0: i32) -> (i32, i32) {
    %c0_i32 = arith.constant 0 : i32
    %c0_i32_0 = arith.constant 0 : i32
    %c0_i32_1 = arith.constant 0 : i32
    return %c0_i32, %c0_i32_0 : i32, i32
  }
  func.func @transform_5(%arg0: i32) -> (i32, i32) {
    %c0_i32 = arith.constant 0 : i32
    %c0_i32_0 = arith.constant 0 : i32
    %c0_i32_1 = arith.constant 0 : i32
    return %c0_i32, %c0_i32_0 : i32, i32
  }
  func.func @transform_6(%arg0: i32) -> (i32, i32) {
    %c0_i32 = arith.constant 0 : i32
    %c0_i32_0 = arith.constant 0 : i32
    %c0_i32_1 = arith.constant 0 : i32
    return %c0_i32, %c0_i32_0 : i32, i32
  }
  func.func @transform_7(%arg0: i32) -> (i32, i32) {
    %c0_i32 = arith.constant 0 : i32
    %c0_i32_0 = arith.constant 0 : i32
    return %arg0, %c0_i32 : i32, i32
  }
}

</mosaic_0001>

<llo_original>
// kernel: tpu_custom_call.1
$region0: #{tpu_custom_call.1}
  #allocation0 [shape = 'u32[]', space=smem, size = 0x4, offset = 0x4, fixed_abs, tag = 'smem constant byte address 0x4 - core index']
  #allocation1 [shape = 'u32[144,128]{1,0:T(1,128)}', space=vmem, size = 0x12000, scoped, tag = 'internal scratch']
  #allocation2 [shape = 'f32[1,1]{1,0:T(1,128)S(1)}', space=vmem, size = 0x200, scoped, tag = 'scoped memory for tpu_custom_call.1']
  %s0 = inlined_call_operand.hbm [shape: f32[16,32], index: 0, kind: input, shape index: {}]
  %s1 = inlined_call_operand.hbm [shape: f32[32,128], index: 1, kind: input, shape index: {}]
  %s2 = inlined_call_operand.vmem [shape: f32[1,128], index: 2, kind: input, shape index: {}]
  %s3 = inlined_call_operand.hbm [shape: f32[128,128], index: 3, kind: input, shape index: {}]
  %s4 = inlined_call_operand.vmem [shape: f32[1,128], index: 4, kind: input, shape index: {}]
  %s5 = inlined_call_operand.vmem [shape: f32[1,128], index: 5, kind: input, shape index: {}]
  %s6 = inlined_call_operand.<no memory space> [shape: f32[1,1], index: 6, kind: input, shape index: {}]
  %s7 = inlined_call_operand.vmem [shape: f32[16,1], index: 7, kind: output, shape index: {}]
  %s8 = sld [smem:[#allocation0]]
  $region50: #{tpu_custom_call.1} parent=0
    _
  %s10 = ssub.s32 1, %s8
  %s11 = scalar_select 0, %s10, %s8
  %v12 = vstv %s6
  %13 = vst [vmem:[#allocation2] sm:$0x1] %v12
  $region1: #{tpu_custom_call.1} parent=0
    #allocation3 [shape = 'u8[8192]{0}', space=vmem, size = 0x2000, scoped, tag = 'input window, operand 0, single buffered']
    #allocation4 [shape = 's32[1]{0}', space=sflag, size = 0x4, scoped, tag = 'scoped memory for tpu_custom_call.1']
    #allocation5 [shape = 'u8[16384]{0}', space=vmem, size = 0x4000, scoped, tag = 'input window, operand 1, single buffered']
    #allocation6 [shape = 's32[1]{0}', space=sflag, size = 0x4, scoped, tag = 'scoped memory for tpu_custom_call.1']
    #allocation7 [shape = 'u8[65536]{0}', space=vmem, size = 0x10000, scoped, tag = 'input window, operand 3, single buffered']
    %14 = vsyncpa [#allocation4], 0
    %15 = vsyncpa [#allocation6], 0
    // Predicated region
    $region2: #{tpu_custom_call.1} parent=1 // pred_check
      _
    $region3: #{tpu_custom_call.1} parent=1 // pred_check_branch
      %17 = sbr.rel (0) target = $region5
    $region4: #{tpu_custom_call.1} parent=1 // pred_region
      %s19 = ssub.s32 256, 256
      %20 = vsyncadd [#allocation4], %s19
      %s21 = sshll.u32 [#allocation3], 4
      %s22 = int_to_ptr.vmem [resolvable:$true] %s21
      %27 = dma.hbm_to_vmem [thread:$0]  %s0, 256, %s22, [#allocation4], 128, 128, 8
    $region5: #{tpu_custom_call.1} parent=1 // pred_fallthru
      _
    // Predicated region
    $region6: #{tpu_custom_call.1} parent=1 // pred_check
      _
    $region7: #{tpu_custom_call.1} parent=1 // pred_check_branch
      %29 = sbr.rel (0) target = $region9
    $region8: #{tpu_custom_call.1} parent=1 // pred_region
      %s31 = ssub.s32 512, 512
      %32 = vsyncadd [#allocation6], %s31
      %s33 = sshll.u32 [#allocation5], 4
      %s34 = int_to_ptr.vmem [resolvable:$true] %s33
      %39 = dma.hbm_to_vmem [thread:$0]  %s1, 512, %s34, [#allocation6], 128, 128, 8
    $region9: #{tpu_custom_call.1} parent=1 // pred_fallthru
      _
    // Predicated region
    $region10: #{tpu_custom_call.1} parent=1 // pred_check
      _
    $region11: #{tpu_custom_call.1} parent=1 // pred_check_branch
      %41 = sbr.rel (0) target = $region13
    $region12: #{tpu_custom_call.1} parent=1 // pred_region
      _
    $region13: #{tpu_custom_call.1} parent=1 // pred_fallthru
      _
    // Predicated region
    $region14: #{tpu_custom_call.1} parent=1 // pred_check
      _
    $region15: #{tpu_custom_call.1} parent=1 // pred_check_branch
      %43 = sbr.rel (0) target = $region17
    $region16: #{tpu_custom_call.1} parent=1 // pred_region
      %s45 = ssub.s32 2048, 2048
      %46 = vsyncadd [#allocation6], %s45
      %s47 = sshll.u32 [#allocation7], 4
      %s48 = int_to_ptr.vmem [resolvable:$true] %s47
      %53 = dma.hbm_to_vmem [thread:$0]  %s3, 2048, %s48, [#allocation6], 128, 128, 8
    $region17: #{tpu_custom_call.1} parent=1 // pred_fallthru
      _
    // Predicated region
    $region18: #{tpu_custom_call.1} parent=1 // pred_check
      _
    $region19: #{tpu_custom_call.1} parent=1 // pred_check_branch
      %55 = sbr.rel (0) target = $region21
    $region20: #{tpu_custom_call.1} parent=1 // pred_region
      _
    $region21: #{tpu_custom_call.1} parent=1 // pred_fallthru
      _
    // Predicated region
    $region22: #{tpu_custom_call.1} parent=1 // pred_check
      _
    $region23: #{tpu_custom_call.1} parent=1 // pred_check_branch
      %57 = sbr.rel (0) target = $region25
    $region24: #{tpu_custom_call.1} parent=1 // pred_region
      _
    $region25: #{tpu_custom_call.1} parent=1 // pred_fallthru
      _
    // Predicated region
    $region26: #{tpu_custom_call.1} parent=1 // pred_check
      _
    $region27: #{tpu_custom_call.1} parent=1 // pred_check_branch
      %59 = sbr.rel (0) target = $region29
    $region28: #{tpu_custom_call.1} parent=1 // pred_region
      _
    $region29: #{tpu_custom_call.1} parent=1 // pred_fallthru
      _
    // Predicated region
    $region30: #{tpu_custom_call.1} parent=1 // pred_check
      _
    $region31: #{tpu_custom_call.1} parent=1 // pred_check_branch
      %61 = sbr.rel (0) target = $region33
    $region32: #{tpu_custom_call.1} parent=1 // pred_region
      %62 = dma.done [#allocation4], 256
    $region33: #{tpu_custom_call.1} parent=1 // pred_fallthru
      _
    // Predicated region
    $region34: #{tpu_custom_call.1} parent=1 // pred_check
      _
    $region35: #{tpu_custom_call.1} parent=1 // pred_check_branch
      %64 = sbr.rel (0) target = $region37
    $region36: #{tpu_custom_call.1} parent=1 // pred_region
      %65 = dma.done [#allocation6], 512
    $region37: #{tpu_custom_call.1} parent=1 // pred_fallthru
      _
    // Predicated region
    $region38: #{tpu_custom_call.1} parent=1 // pred_check
      _
    $region39: #{tpu_custom_call.1} parent=1 // pred_check_branch
      %67 = sbr.rel (0) target = $region41
    $region40: #{tpu_custom_call.1} parent=1 // pred_region
      %68 = dma.done [#allocation6], 2048
    $region41: #{tpu_custom_call.1} parent=1 // pred_fallthru
      _
    %v69 = vld [vmem:[#allocation3] sm:$0xff]
    %v70 = vld [vmem:[#allocation3 + $0x8] sm:$0xff]
    %v71 = vld [vmem:[#allocation5] sm:$0xff]
    %v72 = vld [vmem:[#allocation5 + $0x8] sm:$0xff]
    %v73 = vld [vmem:[#allocation5 + $0x10] sm:$0xff]
    %v74 = vld [vmem:[#allocation5 + $0x18] sm:$0xff]
    %v75 = vld [vmem:[%s2] sm:$0x1]
    %v77 = vlaneseq
    %v78 = vshrl.u32 %v77, 7
    %v79 = vsub.s32 0, %v78
    %v80 = vrot.slane %v75, %v79
    %vm82 = vcmask 261120
    %v84 = vsel %vm82, %v69, 0
    %v87 = vsel %vm82, %v70, 0
    %89 = vmatprep.subr.mxu0 0.0
    %90 = vmatpush1.msra.mxu0 %v71
    %91 = vmatprep.subr.mxu0 0.0
    %92 = vmatpush1.msra.mxu0 %v72
    %93 = vmatprep.subr.mxu0 0.0
    %94 = vmatpush1.msra.mxu0 %v73
    %95 = vmatprep.subr.mxu0 0.0
    %96 = vmatpush1.msra.mxu0 %v74
    %97 = vmatprep.subr.mxu0 0.0
    %98 = vmatpush1.msra.mxu0 0.0
    %99 = vmatprep.subr.mxu0 0.0
    %100 = vmatpush1.msra.mxu0 0.0
    %101 = vmatprep.subr.mxu0 0.0
    %102 = vmatpush1.msra.mxu0 0.0
    %103 = vmatprep.subr.mxu0 0.0
    %104 = vmatpush1.msra.mxu0 0.0
    %105 = vmatprep.subr.mxu0 0.0
    %106 = vmatpush1.msra.mxu0 0.0
    %107 = vmatprep.subr.mxu0 0.0
    %108 = vmatpush1.msra.mxu0 0.0
    %109 = vmatprep.subr.mxu0 0.0
    %110 = vmatpush1.msra.mxu0 0.0
    %111 = vmatprep.subr.mxu0 0.0
    %112 = vmatpush1.msra.mxu0 0.0
    %113 = vmatprep.subr.mxu0 0.0
    %114 = vmatpush1.msra.mxu0 0.0
    %115 = vmatprep.subr.mxu0 0.0
    %116 = vmatpush1.msra.mxu0 0.0
    %117 = vmatprep.subr.mxu0 0.0
    %118 = vmatpush1.msra.mxu0 0.0
    %119 = vmatprep.subr.mxu0 0.0
    %120 = vmatpush1.msra.mxu0 0.0
    %121 = vmatprep.subr.mxu0 0.0
    %122 = vmatpush1.msra.mxu0 0.0
    %123 = vmatprep.subr.mxu0 0.0
    %124 = vmatpush1.msra.mxu0 0.0
    %125 = vmatprep.subr.mxu0 0.0
    %126 = vmatpush1.msra.mxu0 0.0
    %127 = vmatprep.subr.mxu0 0.0
    %128 = vmatpush1.msra.mxu0 0.0
    %129 = vmatprep.subr.mxu0 0.0
    %130 = vmatpush1.msra.mxu0 0.0
    %131 = vmatprep.subr.mxu0 0.0
    %132 = vmatpush1.msra.mxu0 0.0
    %133 = vmatprep.subr.mxu0 0.0
    %134 = vmatpush1.msra.mxu0 0.0
    %135 = vmatprep.subr.mxu0 0.0
    %136 = vmatpush1.msra.mxu0 0.0
    %137 = vmatprep.subr.mxu0 0.0
    %138 = vmatpush1.msra.mxu0 0.0
    %139 = vmatprep.subr.mxu0 0.0
    %140 = vmatpush1.msra.mxu0 0.0
    %141 = vmatprep.subr.mxu0 0.0
    %142 = vmatpush1.msra.mxu0 0.0
    %143 = vmatprep.subr.mxu0 0.0
    %144 = vmatpush1.msra.mxu0 0.0
    %145 = vmatprep.subr.mxu0 0.0
    %146 = vmatpush1.msra.mxu0 0.0
    %147 = vmatprep.subr.mxu0 0.0
    %148 = vmatpush1.msra.mxu0 0.0
    %149 = vmatprep.subr.mxu0 0.0
    %150 = vmatpush1.msra.mxu0 0.0
    %151 = vmatprep.subr.mxu0 0.0
    %152 = vmatpush1.msra.mxu0 0.0
    %153 = vmatprep.mubr.f32.mxu0 0.0
    %154 = vmatmul.mubr.f32.gmra.mrb[0].mxu0 %v84
    %v155 = vpop.f32.mrb[0].mxu0
    %v156 = vadd.f32 %v80, %v155
    %v157 = vpop.f32.mrb[0].mxu0
    %158 = vmatprep.mubr.f32.mxu0 0.0
    %159 = vmatmul.mubr.f32.gmra.mrb[0].mxu0 %v87
    %v160 = vpop.f32.mrb[0].mxu0
    %v161 = vadd.f32 %v80, %v160
    %v162 = vpop.f32.mrb[0].mxu0
    %163 = vdwg.mxu0
    %v164 = vmax.f32 %v156, 0.0
    %v165 = vmax.f32 %v161, 0.0
    %v166 = vld [vmem:[#allocation7] sm:$0xff]
    %v167 = vld [vmem:[#allocation7 + $0x8] sm:$0xff]
    %v168 = vld [vmem:[#allocation7 + $0x10] sm:$0xff]
    %v169 = vld [vmem:[#allocation7 + $0x18] sm:$0xff]
    %v170 = vld [vmem:[#allocation7 + $0x20] sm:$0xff]
    %v171 = vld [vmem:[#allocation7 + $0x28] sm:$0xff]
    %v172 = vld [vmem:[#allocation7 + $0x30] sm:$0xff]
    %v173 = vld [vmem:[#allocation7 + $0x38] sm:$0xff]
    %v174 = vld [vmem:[#allocation7 + $0x40] sm:$0xff]
    %v175 = vld [vmem:[#allocation7 + $0x48] sm:$0xff]
    %v176 = vld [vmem:[#allocation7 + $0x50] sm:$0xff]
    %v177 = vld [vmem:[#allocation7 + $0x58] sm:$0xff]
    %v178 = vld [vmem:[#allocation7 + $0x60] sm:$0xff]
    %v179 = vld [vmem:[#allocation7 + $0x68] sm:$0xff]
    %v180 = vld [vmem:[#allocation7 + $0x70] sm:$0xff]
    %v181 = vld [vmem:[#allocation7 + $0x78] sm:$0xff]
    %v182 = vld [vmem:[%s4] sm:$0x1]
    %v184 = vlaneseq
    %v185 = vshrl.u32 %v184, 7
    %v186 = vsub.s32 0, %v185
    %v187 = vrot.slane %v182, %v186
    %189 = vmatprep.subr.mxu0 0.0
    %190 = vmatpush1.msra.mxu0 %v166
    %191 = vmatprep.subr.mxu0 0.0
    %192 = vmatpush1.msra.mxu0 %v167
    %193 = vmatprep.subr.mxu0 0.0
    %194 = vmatpush1.msra.mxu0 %v168
    %195 = vmatprep.subr.mxu0 0.0
    %196 = vmatpush1.msra.mxu0 %v169
    %197 = vmatprep.subr.mxu0 0.0
    %198 = vmatpush1.msra.mxu0 %v170
    %199 = vmatprep.subr.mxu0 0.0
    %200 = vmatpush1.msra.mxu0 %v171
    %201 = vmatprep.subr.mxu0 0.0
    %202 = vmatpush1.msra.mxu0 %v172
    %203 = vmatprep.subr.mxu0 0.0
    %204 = vmatpush1.msra.mxu0 %v173
    %205 = vmatprep.subr.mxu0 0.0
    %206 = vmatpush1.msra.mxu0 %v174
    %207 = vmatprep.subr.mxu0 0.0
    %208 = vmatpush1.msra.mxu0 %v175
    %209 = vmatprep.subr.mxu0 0.0
    %210 = vmatpush1.msra.mxu0 %v176
    %211 = vmatprep.subr.mxu0 0.0
    %212 = vmatpush1.msra.mxu0 %v177
    %213 = vmatprep.subr.mxu0 0.0
    %214 = vmatpush1.msra.mxu0 %v178
    %215 = vmatprep.subr.mxu0 0.0
    %216 = vmatpush1.msra.mxu0 %v179
    %217 = vmatprep.subr.mxu0 0.0
    %218 = vmatpush1.msra.mxu0 %v180
    %219 = vmatprep.subr.mxu0 0.0
    %220 = vmatpush1.msra.mxu0 %v181
    %221 = vmatprep.subr.mxu0 0.0
    %222 = vmatpush1.msra.mxu0 0.0
    %223 = vmatprep.subr.mxu0 0.0
    %224 = vmatpush1.msra.mxu0 0.0
    %225 = vmatprep.subr.mxu0 0.0
    %226 = vmatpush1.msra.mxu0 0.0
    %227 = vmatprep.subr.mxu0 0.0
    %228 = vmatpush1.msra.mxu0 0.0
    %229 = vmatprep.subr.mxu0 0.0
    %230 = vmatpush1.msra.mxu0 0.0
    %231 = vmatprep.subr.mxu0 0.0
    %232 = vmatpush1.msra.mxu0 0.0
    %233 = vmatprep.subr.mxu0 0.0
    %234 = vmatpush1.msra.mxu0 0.0
    %235 = vmatprep.subr.mxu0 0.0
    %236 = vmatpush1.msra.mxu0 0.0
    %237 = vmatprep.subr.mxu0 0.0
    %238 = vmatpush1.msra.mxu0 0.0
    %239 = vmatprep.subr.mxu0 0.0
    %240 = vmatpush1.msra.mxu0 0.0
    %241 = vmatprep.subr.mxu0 0.0
    %242 = vmatpush1.msra.mxu0 0.0
    %243 = vmatprep.subr.mxu0 0.0
    %244 = vmatpush1.msra.mxu0 0.0
    %245 = vmatprep.subr.mxu0 0.0
    %246 = vmatpush1.msra.mxu0 0.0
    %247 = vmatprep.subr.mxu0 0.0
    %248 = vmatpush1.msra.mxu0 0.0
    %249 = vmatprep.subr.mxu0 0.0
    %250 = vmatpush1.msra.mxu0 0.0
    %251 = vmatprep.subr.mxu0 0.0
    %252 = vmatpush1.msra.mxu0 0.0
    %253 = vmatprep.mubr.f32.mxu0 0.0
    %254 = vmatmul.mubr.f32.gmra.mrb[0].mxu0 %v164
    %v255 = vpop.f32.mrb[0].mxu0
    %v256 = vadd.f32 %v187, %v255
    %v257 = vpop.f32.mrb[0].mxu0
    %258 = vmatprep.mubr.f32.mxu0 0.0
    %259 = vmatmul.mubr.f32.gmra.mrb[0].mxu0 %v165
    %v260 = vpop.f32.mrb[0].mxu0
    %v261 = vadd.f32 %v187, %v260
    %v262 = vpop.f32.mrb[0].mxu0
    %263 = vdwg.mxu0
    %v264 = vmax.f32 %v256, 0.0
    %v265 = vmax.f32 %v261, 0.0
    %266 = vmatprep.subr.mxu0 0.0
    %267 = vmatpush1.msra.mxu0 %v166
    %268 = vmatprep.subr.mxu0 0.0
    %269 = vmatpush1.msra.mxu0 %v167
    %270 = vmatprep.subr.mxu0 0.0
    %271 = vmatpush1.msra.mxu0 %v168
    %272 = vmatprep.subr.mxu0 0.0
    %273 = vmatpush1.msra.mxu0 %v169
    %274 = vmatprep.subr.mxu0 0.0
    %275 = vmatpush1.msra.mxu0 %v170
    %276 = vmatprep.subr.mxu0 0.0
    %277 = vmatpush1.msra.mxu0 %v171
    %278 = vmatprep.subr.mxu0 0.0
    %279 = vmatpush1.msra.mxu0 %v172
    %280 = vmatprep.subr.mxu0 0.0
    %281 = vmatpush1.msra.mxu0 %v173
    %282 = vmatprep.subr.mxu0 0.0
    %283 = vmatpush1.msra.mxu0 %v174
    %284 = vmatprep.subr.mxu0 0.0
    %285 = vmatpush1.msra.mxu0 %v175
    %286 = vmatprep.subr.mxu0 0.0
    %287 = vmatpush1.msra.mxu0 %v176
    %288 = vmatprep.subr.mxu0 0.0
    %289 = vmatpush1.msra.mxu0 %v177
    %290 = vmatprep.subr.mxu0 0.0
    %291 = vmatpush1.msra.mxu0 %v178
    %292 = vmatprep.subr.mxu0 0.0
    %293 = vmatpush1.msra.mxu0 %v179
    %294 = vmatprep.subr.mxu0 0.0
    %295 = vmatpush1.msra.mxu0 %v180
    %296 = vmatprep.subr.mxu0 0.0
    %297 = vmatpush1.msra.mxu0 %v181
    %298 = vmatprep.subr.mxu0 0.0
    %299 = vmatpush1.msra.mxu0 0.0
    %300 = vmatprep.subr.mxu0 0.0
    %301 = vmatpush1.msra.mxu0 0.0
    %302 = vmatprep.subr.mxu0 0.0
    %303 = vmatpush1.msra.mxu0 0.0
    %304 = vmatprep.subr.mxu0 0.0
    %305 = vmatpush1.msra.mxu0 0.0
    %306 = vmatprep.subr.mxu0 0.0
    %307 = vmatpush1.msra.mxu0 0.0
    %308 = vmatprep.subr.mxu0 0.0
    %309 = vmatpush1.msra.mxu0 0.0
    %310 = vmatprep.subr.mxu0 0.0
    %311 = vmatpush1.msra.mxu0 0.0
    %312 = vmatprep.subr.mxu0 0.0
    %313 = vmatpush1.msra.mxu0 0.0
    %314 = vmatprep.subr.mxu0 0.0
    %315 = vmatpush1.msra.mxu0 0.0
    %316 = vmatprep.subr.mxu0 0.0
    %317 = vmatpush1.msra.mxu0 0.0
    %318 = vmatprep.subr.mxu0 0.0
    %319 = vmatpush1.msra.mxu0 0.0
    %320 = vmatprep.subr.mxu0 0.0
    %321 = vmatpush1.msra.mxu0 0.0
    %322 = vmatprep.subr.mxu0 0.0
    %323 = vmatpush1.msra.mxu0 0.0
    %324 = vmatprep.subr.mxu0 0.0
    %325 = vmatpush1.msra.mxu0 0.0
    %326 = vmatprep.subr.mxu0 0.0
    %327 = vmatpush1.msra.mxu0 0.0
    %328 = vmatprep.subr.mxu0 0.0
    %329 = vmatpush1.msra.mxu0 0.0
    %330 = vmatprep.mubr.f32.mxu0 0.0
    %331 = vmatmul.mubr.f32.gmra.mrb[0].mxu0 %v264
    %v332 = vpop.f32.mrb[0].mxu0
    %v333 = vadd.f32 %v187, %v332
    %v334 = vpop.f32.mrb[0].mxu0
    %335 = vmatprep.mubr.f32.mxu0 0.0
    %336 = vmatmul.mubr.f32.gmra.mrb[0].mxu0 %v265
    %v337 = vpop.f32.mrb[0].mxu0
    %v338 = vadd.f32 %v187, %v337
    %v339 = vpop.f32.mrb[0].mxu0
    %340 = vdwg.mxu0
    %v341 = vmax.f32 %v333, 0.0
    %v342 = vmax.f32 %v338, 0.0
    %343 = vmatprep.subr.mxu0 0.0
    %344 = vmatpush1.msra.mxu0 %v166
    %345 = vmatprep.subr.mxu0 0.0
    %346 = vmatpush1.msra.mxu0 %v167
    %347 = vmatprep.subr.mxu0 0.0
    %348 = vmatpush1.msra.mxu0 %v168
    %349 = vmatprep.subr.mxu0 0.0
    %350 = vmatpush1.msra.mxu0 %v169
    %351 = vmatprep.subr.mxu0 0.0
    %352 = vmatpush1.msra.mxu0 %v170
    %353 = vmatprep.subr.mxu0 0.0
    %354 = vmatpush1.msra.mxu0 %v171
    %355 = vmatprep.subr.mxu0 0.0
    %356 = vmatpush1.msra.mxu0 %v172
    %357 = vmatprep.subr.mxu0 0.0
    %358 = vmatpush1.msra.mxu0 %v173
    %359 = vmatprep.subr.mxu0 0.0
    %360 = vmatpush1.msra.mxu0 %v174
    %361 = vmatprep.subr.mxu0 0.0
    %362 = vmatpush1.msra.mxu0 %v175
    %363 = vmatprep.subr.mxu0 0.0
    %364 = vmatpush1.msra.mxu0 %v176
    %365 = vmatprep.subr.mxu0 0.0
    %366 = vmatpush1.msra.mxu0 %v177
    %367 = vmatprep.subr.mxu0 0.0
    %368 = vmatpush1.msra.mxu0 %v178
    %369 = vmatprep.subr.mxu0 0.0
    %370 = vmatpush1.msra.mxu0 %v179
    %371 = vmatprep.subr.mxu0 0.0
    %372 = vmatpush1.msra.mxu0 %v180
    %373 = vmatprep.subr.mxu0 0.0
    %374 = vmatpush1.msra.mxu0 %v181
    %375 = vmatprep.subr.mxu0 0.0
    %376 = vmatpush1.msra.mxu0 0.0
    %377 = vmatprep.subr.mxu0 0.0
    %378 = vmatpush1.msra.mxu0 0.0
    %379 = vmatprep.subr.mxu0 0.0
    %380 = vmatpush1.msra.mxu0 0.0
    %381 = vmatprep.subr.mxu0 0.0
    %382 = vmatpush1.msra.mxu0 0.0
    %383 = vmatprep.subr.mxu0 0.0
    %384 = vmatpush1.msra.mxu0 0.0
    %385 = vmatprep.subr.mxu0 0.0
    %386 = vmatpush1.msra.mxu0 0.0
    %387 = vmatprep.subr.mxu0 0.0
    %388 = vmatpush1.msra.mxu0 0.0
    %389 = vmatprep.subr.mxu0 0.0
    %390 = vmatpush1.msra.mxu0 0.0
    %391 = vmatprep.subr.mxu0 0.0
    %392 = vmatpush1.msra.mxu0 0.0
    %393 = vmatprep.subr.mxu0 0.0
    %394 = vmatpush1.msra.mxu0 0.0
    %395 = vmatprep.subr.mxu0 0.0
    %396 = vmatpush1.msra.mxu0 0.0
    %397 = vmatprep.subr.mxu0 0.0
    %398 = vmatpush1.msra.mxu0 0.0
    %399 = vmatprep.subr.mxu0 0.0
    %400 = vmatpush1.msra.mxu0 0.0
    %401 = vmatprep.subr.mxu0 0.0
    %402 = vmatpush1.msra.mxu0 0.0
    %403 = vmatprep.subr.mxu0 0.0
    %404 = vmatpush1.msra.mxu0 0.0
    %405 = vmatprep.subr.mxu0 0.0
    %406 = vmatpush1.msra.mxu0 0.0
    %407 = vmatprep.mubr.f32.mxu0 0.0
    %408 = vmatmul.mubr.f32.gmra.mrb[0].mxu0 %v341
    %v409 = vpop.f32.mrb[0].mxu0
    %v410 = vadd.f32 %v187, %v409
    %v411 = vpop.f32.mrb[0].mxu0
    %412 = vmatprep.mubr.f32.mxu0 0.0
    %413 = vmatmul.mubr.f32.gmra.mrb[0].mxu0 %v342
    %v414 = vpop.f32.mrb[0].mxu0
    %v415 = vadd.f32 %v187, %v414
    %v416 = vpop.f32.mrb[0].mxu0
    %417 = vdwg.mxu0
    %v418 = vmax.f32 %v410, 0.0
    %v419 = vmax.f32 %v415, 0.0
    %420 = vmatprep.subr.mxu0 0.0
    %421 = vmatpush1.msra.mxu0 %v166
    %422 = vmatprep.subr.mxu0 0.0
    %423 = vmatpush1.msra.mxu0 %v167
    %424 = vmatprep.subr.mxu0 0.0
    %425 = vmatpush1.msra.mxu0 %v168
    %426 = vmatprep.subr.mxu0 0.0
    %427 = vmatpush1.msra.mxu0 %v169
    %428 = vmatprep.subr.mxu0 0.0
    %429 = vmatpush1.msra.mxu0 %v170
    %430 = vmatprep.subr.mxu0 0.0
    %431 = vmatpush1.msra.mxu0 %v171
    %432 = vmatprep.subr.mxu0 0.0
    %433 = vmatpush1.msra.mxu0 %v172
    %434 = vmatprep.subr.mxu0 0.0
    %435 = vmatpush1.msra.mxu0 %v173
    %436 = vmatprep.subr.mxu0 0.0
    %437 = vmatpush1.msra.mxu0 %v174
    %438 = vmatprep.subr.mxu0 0.0
    %439 = vmatpush1.msra.mxu0 %v175
    %440 = vmatprep.subr.mxu0 0.0
    %441 = vmatpush1.msra.mxu0 %v176
    %442 = vmatprep.subr.mxu0 0.0
    %443 = vmatpush1.msra.mxu0 %v177
    %444 = vmatprep.subr.mxu0 0.0
    %445 = vmatpush1.msra.mxu0 %v178
    %446 = vmatprep.subr.mxu0 0.0
    %447 = vmatpush1.msra.mxu0 %v179
    %448 = vmatprep.subr.mxu0 0.0
    %449 = vmatpush1.msra.mxu0 %v180
    %450 = vmatprep.subr.mxu0 0.0
    %451 = vmatpush1.msra.mxu0 %v181
    %452 = vmatprep.subr.mxu0 0.0
    %453 = vmatpush1.msra.mxu0 0.0
    %454 = vmatprep.subr.mxu0 0.0
    %455 = vmatpush1.msra.mxu0 0.0
    %456 = vmatprep.subr.mxu0 0.0
    %457 = vmatpush1.msra.mxu0 0.0
    %458 = vmatprep.subr.mxu0 0.0
    %459 = vmatpush1.msra.mxu0 0.0
    %460 = vmatprep.subr.mxu0 0.0
    %461 = vmatpush1.msra.mxu0 0.0
    %462 = vmatprep.subr.mxu0 0.0
    %463 = vmatpush1.msra.mxu0 0.0
    %464 = vmatprep.subr.mxu0 0.0
    %465 = vmatpush1.msra.mxu0 0.0
    %466 = vmatprep.subr.mxu0 0.0
    %467 = vmatpush1.msra.mxu0 0.0
    %468 = vmatprep.subr.mxu0 0.0
    %469 = vmatpush1.msra.mxu0 0.0
    %470 = vmatprep.subr.mxu0 0.0
    %471 = vmatpush1.msra.mxu0 0.0
    %472 = vmatprep.subr.mxu0 0.0
    %473 = vmatpush1.msra.mxu0 0.0
    %474 = vmatprep.subr.mxu0 0.0
    %475 = vmatpush1.msra.mxu0 0.0
    %476 = vmatprep.subr.mxu0 0.0
    %477 = vmatpush1.msra.mxu0 0.0
    %478 = vmatprep.subr.mxu0 0.0
    %479 = vmatpush1.msra.mxu0 0.0
    %480 = vmatprep.subr.mxu0 0.0
    %481 = vmatpush1.msra.mxu0 0.0
    %482 = vmatprep.subr.mxu0 0.0
    %483 = vmatpush1.msra.mxu0 0.0
    %484 = vmatprep.mubr.f32.mxu0 0.0
    %485 = vmatmul.mubr.f32.gmra.mrb[0].mxu0 %v418
    %v486 = vpop.f32.mrb[0].mxu0
    %v487 = vadd.f32 %v187, %v486
    %v488 = vpop.f32.mrb[0].mxu0
    %489 = vmatprep.mubr.f32.mxu0 0.0
    %490 = vmatmul.mubr.f32.gmra.mrb[0].mxu0 %v419
    %v491 = vpop.f32.mrb[0].mxu0
    %v492 = vadd.f32 %v187, %v491
    %v493 = vpop.f32.mrb[0].mxu0
    %494 = vdwg.mxu0
    %v495 = vmax.f32 %v487, 0.0
    %v496 = vmax.f32 %v492, 0.0
    %497 = vmatprep.subr.mxu0 0.0
    %498 = vmatpush1.msra.mxu0 %v166
    %499 = vmatprep.subr.mxu0 0.0
    %500 = vmatpush1.msra.mxu0 %v167
    %501 = vmatprep.subr.mxu0 0.0
    %502 = vmatpush1.msra.mxu0 %v168
    %503 = vmatprep.subr.mxu0 0.0
    %504 = vmatpush1.msra.mxu0 %v169
    %505 = vmatprep.subr.mxu0 0.0
    %506 = vmatpush1.msra.mxu0 %v170
    %507 = vmatprep.subr.mxu0 0.0
    %508 = vmatpush1.msra.mxu0 %v171
    %509 = vmatprep.subr.mxu0 0.0
    %510 = vmatpush1.msra.mxu0 %v172
    %511 = vmatprep.subr.mxu0 0.0
    %512 = vmatpush1.msra.mxu0 %v173
    %513 = vmatprep.subr.mxu0 0.0
    %514 = vmatpush1.msra.mxu0 %v174
    %515 = vmatprep.subr.mxu0 0.0
    %516 = vmatpush1.msra.mxu0 %v175
    %517 = vmatprep.subr.mxu0 0.0
    %518 = vmatpush1.msra.mxu0 %v176
    %519 = vmatprep.subr.mxu0 0.0
    %520 = vmatpush1.msra.mxu0 %v177
    %521 = vmatprep.subr.mxu0 0.0
    %522 = vmatpush1.msra.mxu0 %v178
    %523 = vmatprep.subr.mxu0 0.0
    %524 = vmatpush1.msra.mxu0 %v179
    %525 = vmatprep.subr.mxu0 0.0
    %526 = vmatpush1.msra.mxu0 %v180
    %527 = vmatprep.subr.mxu0 0.0
    %528 = vmatpush1.msra.mxu0 %v181
    %529 = vmatprep.subr.mxu0 0.0
    %530 = vmatpush1.msra.mxu0 0.0
    %531 = vmatprep.subr.mxu0 0.0
    %532 = vmatpush1.msra.mxu0 0.0
    %533 = vmatprep.subr.mxu0 0.0
    %534 = vmatpush1.msra.mxu0 0.0
    %535 = vmatprep.subr.mxu0 0.0
    %536 = vmatpush1.msra.mxu0 0.0
    %537 = vmatprep.subr.mxu0 0.0
    %538 = vmatpush1.msra.mxu0 0.0
    %539 = vmatprep.subr.mxu0 0.0
    %540 = vmatpush1.msra.mxu0 0.0
    %541 = vmatprep.subr.mxu0 0.0
    %542 = vmatpush1.msra.mxu0 0.0
    %543 = vmatprep.subr.mxu0 0.0
    %544 = vmatpush1.msra.mxu0 0.0
    %545 = vmatprep.subr.mxu0 0.0
    %546 = vmatpush1.msra.mxu0 0.0
    %547 = vmatprep.subr.mxu0 0.0
    %548 = vmatpush1.msra.mxu0 0.0
    %549 = vmatprep.subr.mxu0 0.0
    %550 = vmatpush1.msra.mxu0 0.0
    %551 = vmatprep.subr.mxu0 0.0
    %552 = vmatpush1.msra.mxu0 0.0
    %553 = vmatprep.subr.mxu0 0.0
    %554 = vmatpush1.msra.mxu0 0.0
    %555 = vmatprep.subr.mxu0 0.0
    %556 = vmatpush1.msra.mxu0 0.0
    %557 = vmatprep.subr.mxu0 0.0
    %558 = vmatpush1.msra.mxu0 0.0
    %559 = vmatprep.subr.mxu0 0.0
    %560 = vmatpush1.msra.mxu0 0.0
    %561 = vmatprep.mubr.f32.mxu0 0.0
    %562 = vmatmul.mubr.f32.gmra.mrb[0].mxu0 %v495
    %v563 = vpop.f32.mrb[0].mxu0
    %v564 = vadd.f32 %v187, %v563
    %v565 = vpop.f32.mrb[0].mxu0
    %566 = vmatprep.mubr.f32.mxu0 0.0
    %567 = vmatmul.mubr.f32.gmra.mrb[0].mxu0 %v496
    %v568 = vpop.f32.mrb[0].mxu0
    %v569 = vadd.f32 %v187, %v568
    %v570 = vpop.f32.mrb[0].mxu0
    %571 = vdwg.mxu0
    %v572 = vmax.f32 %v564, 0.0
    %v573 = vmax.f32 %v569, 0.0
    %574 = vmatprep.subr.mxu0 0.0
    %575 = vmatpush1.msra.mxu0 %v166
    %576 = vmatprep.subr.mxu0 0.0
    %577 = vmatpush1.msra.mxu0 %v167
    %578 = vmatprep.subr.mxu0 0.0
    %579 = vmatpush1.msra.mxu0 %v168
    %580 = vmatprep.subr.mxu0 0.0
    %581 = vmatpush1.msra.mxu0 %v169
    %582 = vmatprep.subr.mxu0 0.0
    %583 = vmatpush1.msra.mxu0 %v170
    %584 = vmatprep.subr.mxu0 0.0
    %585 = vmatpush1.msra.mxu0 %v171
    %586 = vmatprep.subr.mxu0 0.0
    %587 = vmatpush1.msra.mxu0 %v172
    %588 = vmatprep.subr.mxu0 0.0
    %589 = vmatpush1.msra.mxu0 %v173
    %590 = vmatprep.subr.mxu0 0.0
    %591 = vmatpush1.msra.mxu0 %v174
    %592 = vmatprep.subr.mxu0 0.0
    %593 = vmatpush1.msra.mxu0 %v175
    %594 = vmatprep.subr.mxu0 0.0
    %595 = vmatpush1.msra.mxu0 %v176
    %596 = vmatprep.subr.mxu0 0.0
    %597 = vmatpush1.msra.mxu0 %v177
    %598 = vmatprep.subr.mxu0 0.0
    %599 = vmatpush1.msra.mxu0 %v178
    %600 = vmatprep.subr.mxu0 0.0
    %601 = vmatpush1.msra.mxu0 %v179
    %602 = vmatprep.subr.mxu0 0.0
    %603 = vmatpush1.msra.mxu0 %v180
    %604 = vmatprep.subr.mxu0 0.0
    %605 = vmatpush1.msra.mxu0 %v181
    %606 = vmatprep.subr.mxu0 0.0
    %607 = vmatpush1.msra.mxu0 0.0
    %608 = vmatprep.subr.mxu0 0.0
    %609 = vmatpush1.msra.mxu0 0.0
    %610 = vmatprep.subr.mxu0 0.0
    %611 = vmatpush1.msra.mxu0 0.0
    %612 = vmatprep.subr.mxu0 0.0
    %613 = vmatpush1.msra.mxu0 0.0
    %614 = vmatprep.subr.mxu0 0.0
    %615 = vmatpush1.msra.mxu0 0.0
    %616 = vmatprep.subr.mxu0 0.0
    %617 = vmatpush1.msra.mxu0 0.0
    %618 = vmatprep.subr.mxu0 0.0
    %619 = vmatpush1.msra.mxu0 0.0
    %620 = vmatprep.subr.mxu0 0.0
    %621 = vmatpush1.msra.mxu0 0.0
    %622 = vmatprep.subr.mxu0 0.0
    %623 = vmatpush1.msra.mxu0 0.0
    %624 = vmatprep.subr.mxu0 0.0
    %625 = vmatpush1.msra.mxu0 0.0
    %626 = vmatprep.subr.mxu0 0.0
    %627 = vmatpush1.msra.mxu0 0.0
    %628 = vmatprep.subr.mxu0 0.0
    %629 = vmatpush1.msra.mxu0 0.0
    %630 = vmatprep.subr.mxu0 0.0
    %631 = vmatpush1.msra.mxu0 0.0
    %632 = vmatprep.subr.mxu0 0.0
    %633 = vmatpush1.msra.mxu0 0.0
    %634 = vmatprep.subr.mxu0 0.0
    %635 = vmatpush1.msra.mxu0 0.0
    %636 = vmatprep.subr.mxu0 0.0
    %637 = vmatpush1.msra.mxu0 0.0
    %638 = vmatprep.mubr.f32.mxu0 0.0
    %639 = vmatmul.mubr.f32.gmra.mrb[0].mxu0 %v572
    %v640 = vpop.f32.mrb[0].mxu0
    %v641 = vadd.f32 %v187, %v640
    %v642 = vpop.f32.mrb[0].mxu0
    %643 = vmatprep.mubr.f32.mxu0 0.0
    %644 = vmatmul.mubr.f32.gmra.mrb[0].mxu0 %v573
    %v645 = vpop.f32.mrb[0].mxu0
    %v646 = vadd.f32 %v187, %v645
    %v647 = vpop.f32.mrb[0].mxu0
    %648 = vdwg.mxu0
    %v649 = vmax.f32 %v641, 0.0
    %v650 = vmax.f32 %v646, 0.0
    %651 = vmatprep.subr.mxu0 0.0
    %652 = vmatpush1.msra.mxu0 %v166
    %653 = vmatprep.subr.mxu0 0.0
    %654 = vmatpush1.msra.mxu0 %v167
    %655 = vmatprep.subr.mxu0 0.0
    %656 = vmatpush1.msra.mxu0 %v168
    %657 = vmatprep.subr.mxu0 0.0
    %658 = vmatpush1.msra.mxu0 %v169
    %659 = vmatprep.subr.mxu0 0.0
    %660 = vmatpush1.msra.mxu0 %v170
    %661 = vmatprep.subr.mxu0 0.0
    %662 = vmatpush1.msra.mxu0 %v171
    %663 = vmatprep.subr.mxu0 0.0
    %664 = vmatpush1.msra.mxu0 %v172
    %665 = vmatprep.subr.mxu0 0.0
    %666 = vmatpush1.msra.mxu0 %v173
    %667 = vmatprep.subr.mxu0 0.0
    %668 = vmatpush1.msra.mxu0 %v174
    %669 = vmatprep.subr.mxu0 0.0
    %670 = vmatpush1.msra.mxu0 %v175
    %671 = vmatprep.subr.mxu0 0.0
    %672 = vmatpush1.msra.mxu0 %v176
    %673 = vmatprep.subr.mxu0 0.0
    %674 = vmatpush1.msra.mxu0 %v177
    %675 = vmatprep.subr.mxu0 0.0
    %676 = vmatpush1.msra.mxu0 %v178
    %677 = vmatprep.subr.mxu0 0.0
    %678 = vmatpush1.msra.mxu0 %v179
    %679 = vmatprep.subr.mxu0 0.0
    %680 = vmatpush1.msra.mxu0 %v180
    %681 = vmatprep.subr.mxu0 0.0
    %682 = vmatpush1.msra.mxu0 %v181
    %683 = vmatprep.subr.mxu0 0.0
    %684 = vmatpush1.msra.mxu0 0.0
    %685 = vmatprep.subr.mxu0 0.0
    %686 = vmatpush1.msra.mxu0 0.0
    %687 = vmatprep.subr.mxu0 0.0
    %688 = vmatpush1.msra.mxu0 0.0
    %689 = vmatprep.subr.mxu0 0.0
    %690 = vmatpush1.msra.mxu0 0.0
    %691 = vmatprep.subr.mxu0 0.0
    %692 = vmatpush1.msra.mxu0 0.0
    %693 = vmatprep.subr.mxu0 0.0
    %694 = vmatpush1.msra.mxu0 0.0
    %695 = vmatprep.subr.mxu0 0.0
    %696 = vmatpush1.msra.mxu0 0.0
    %697 = vmatprep.subr.mxu0 0.0
    %698 = vmatpush1.msra.mxu0 0.0
    %699 = vmatprep.subr.mxu0 0.0
    %700 = vmatpush1.msra.mxu0 0.0
    %701 = vmatprep.subr.mxu0 0.0
    %702 = vmatpush1.msra.mxu0 0.0
    %703 = vmatprep.subr.mxu0 0.0
    %704 = vmatpush1.msra.mxu0 0.0
    %705 = vmatprep.subr.mxu0 0.0
    %706 = vmatpush1.msra.mxu0 0.0
    %707 = vmatprep.subr.mxu0 0.0
    %708 = vmatpush1.msra.mxu0 0.0
    %709 = vmatprep.subr.mxu0 0.0
    %710 = vmatpush1.msra.mxu0 0.0
    %711 = vmatprep.subr.mxu0 0.0
    %712 = vmatpush1.msra.mxu0 0.0
    %713 = vmatprep.subr.mxu0 0.0
    %714 = vmatpush1.msra.mxu0 0.0
    %715 = vmatprep.mubr.f32.mxu0 0.0
    %716 = vmatmul.mubr.f32.gmra.mrb[0].mxu0 %v649
    %v717 = vpop.f32.mrb[0].mxu0
    %v718 = vadd.f32 %v187, %v717
    %v719 = vpop.f32.mrb[0].mxu0
    %720 = vmatprep.mubr.f32.mxu0 0.0
    %721 = vmatmul.mubr.f32.gmra.mrb[0].mxu0 %v650
    %v722 = vpop.f32.mrb[0].mxu0
    %v723 = vadd.f32 %v187, %v722
    %v724 = vpop.f32.mrb[0].mxu0
    %725 = vdwg.mxu0
    %v726 = vmax.f32 %v718, 0.0
    %v727 = vmax.f32 %v723, 0.0
    %728 = vmatprep.subr.mxu0 0.0
    %729 = vmatpush1.msra.mxu0 %v166
    %730 = vmatprep.subr.mxu0 0.0
    %731 = vmatpush1.msra.mxu0 %v167
    %732 = vmatprep.subr.mxu0 0.0
    %733 = vmatpush1.msra.mxu0 %v168
    %734 = vmatprep.subr.mxu0 0.0
    %735 = vmatpush1.msra.mxu0 %v169
    %736 = vmatprep.subr.mxu0 0.0
    %737 = vmatpush1.msra.mxu0 %v170
    %738 = vmatprep.subr.mxu0 0.0
    %739 = vmatpush1.msra.mxu0 %v171
    %740 = vmatprep.subr.mxu0 0.0
    %741 = vmatpush1.msra.mxu0 %v172
    %742 = vmatprep.subr.mxu0 0.0
    %743 = vmatpush1.msra.mxu0 %v173
    %744 = vmatprep.subr.mxu0 0.0
    %745 = vmatpush1.msra.mxu0 %v174
    %746 = vmatprep.subr.mxu0 0.0
    %747 = vmatpush1.msra.mxu0 %v175
    %748 = vmatprep.subr.mxu0 0.0
    %749 = vmatpush1.msra.mxu0 %v176
    %750 = vmatprep.subr.mxu0 0.0
    %751 = vmatpush1.msra.mxu0 %v177
    %752 = vmatprep.subr.mxu0 0.0
    %753 = vmatpush1.msra.mxu0 %v178
    %754 = vmatprep.subr.mxu0 0.0
    %755 = vmatpush1.msra.mxu0 %v179
    %756 = vmatprep.subr.mxu0 0.0
    %757 = vmatpush1.msra.mxu0 %v180
    %758 = vmatprep.subr.mxu0 0.0
    %759 = vmatpush1.msra.mxu0 %v181
    %760 = vmatprep.subr.mxu0 0.0
    %761 = vmatpush1.msra.mxu0 0.0
    %762 = vmatprep.subr.mxu0 0.0
    %763 = vmatpush1.msra.mxu0 0.0
    %764 = vmatprep.subr.mxu0 0.0
    %765 = vmatpush1.msra.mxu0 0.0
    %766 = vmatprep.subr.mxu0 0.0
    %767 = vmatpush1.msra.mxu0 0.0
    %768 = vmatprep.subr.mxu0 0.0
    %769 = vmatpush1.msra.mxu0 0.0
    %770 = vmatprep.subr.mxu0 0.0
    %771 = vmatpush1.msra.mxu0 0.0
    %772 = vmatprep.subr.mxu0 0.0
    %773 = vmatpush1.msra.mxu0 0.0
    %774 = vmatprep.subr.mxu0 0.0
    %775 = vmatpush1.msra.mxu0 0.0
    %776 = vmatprep.subr.mxu0 0.0
    %777 = vmatpush1.msra.mxu0 0.0
    %778 = vmatprep.subr.mxu0 0.0
    %779 = vmatpush1.msra.mxu0 0.0
    %780 = vmatprep.subr.mxu0 0.0
    %781 = vmatpush1.msra.mxu0 0.0
    %782 = vmatprep.subr.mxu0 0.0
    %783 = vmatpush1.msra.mxu0 0.0
    %784 = vmatprep.subr.mxu0 0.0
    %785 = vmatpush1.msra.mxu0 0.0
    %786 = vmatprep.subr.mxu0 0.0
    %787 = vmatpush1.msra.mxu0 0.0
    %788 = vmatprep.subr.mxu0 0.0
    %789 = vmatpush1.msra.mxu0 0.0
    %790 = vmatprep.subr.mxu0 0.0
    %791 = vmatpush1.msra.mxu0 0.0
    %792 = vmatprep.mubr.f32.mxu0 0.0
    %793 = vmatmul.mubr.f32.gmra.mrb[0].mxu0 %v726
    %v794 = vpop.f32.mrb[0].mxu0
    %v795 = vadd.f32 %v187, %v794
    %v796 = vpop.f32.mrb[0].mxu0
    %797 = vmatprep.mubr.f32.mxu0 0.0
    %798 = vmatmul.mubr.f32.gmra.mrb[0].mxu0 %v727
    %v799 = vpop.f32.mrb[0].mxu0
    %v800 = vadd.f32 %v187, %v799
    %v801 = vpop.f32.mrb[0].mxu0
    %802 = vdwg.mxu0
    %v803 = vmax.f32 %v795, 0.0
    %v804 = vmax.f32 %v800, 0.0
    %805 = vmatprep.subr.mxu0 0.0
    %806 = vmatpush1.msra.mxu0 %v166
    %807 = vmatprep.subr.mxu0 0.0
    %808 = vmatpush1.msra.mxu0 %v167
    %809 = vmatprep.subr.mxu0 0.0
    %810 = vmatpush1.msra.mxu0 %v168
    %811 = vmatprep.subr.mxu0 0.0
    %812 = vmatpush1.msra.mxu0 %v169
    %813 = vmatprep.subr.mxu0 0.0
    %814 = vmatpush1.msra.mxu0 %v170
    %815 = vmatprep.subr.mxu0 0.0
    %816 = vmatpush1.msra.mxu0 %v171
    %817 = vmatprep.subr.mxu0 0.0
    %818 = vmatpush1.msra.mxu0 %v172
    %819 = vmatprep.subr.mxu0 0.0
    %820 = vmatpush1.msra.mxu0 %v173
    %821 = vmatprep.subr.mxu0 0.0
    %822 = vmatpush1.msra.mxu0 %v174
    %823 = vmatprep.subr.mxu0 0.0
    %824 = vmatpush1.msra.mxu0 %v175
    %825 = vmatprep.subr.mxu0 0.0
    %826 = vmatpush1.msra.mxu0 %v176
    %827 = vmatprep.subr.mxu0 0.0
    %828 = vmatpush1.msra.mxu0 %v177
    %829 = vmatprep.subr.mxu0 0.0
    %830 = vmatpush1.msra.mxu0 %v178
    %831 = vmatprep.subr.mxu0 0.0
    %832 = vmatpush1.msra.mxu0 %v179
    %833 = vmatprep.subr.mxu0 0.0
    %834 = vmatpush1.msra.mxu0 %v180
    %835 = vmatprep.subr.mxu0 0.0
    %836 = vmatpush1.msra.mxu0 %v181
    %837 = vmatprep.subr.mxu0 0.0
    %838 = vmatpush1.msra.mxu0 0.0
    %839 = vmatprep.subr.mxu0 0.0
    %840 = vmatpush1.msra.mxu0 0.0
    %841 = vmatprep.subr.mxu0 0.0
    %842 = vmatpush1.msra.mxu0 0.0
    %843 = vmatprep.subr.mxu0 0.0
    %844 = vmatpush1.msra.mxu0 0.0
    %845 = vmatprep.subr.mxu0 0.0
    %846 = vmatpush1.msra.mxu0 0.0
    %847 = vmatprep.subr.mxu0 0.0
    %848 = vmatpush1.msra.mxu0 0.0
    %849 = vmatprep.subr.mxu0 0.0
    %850 = vmatpush1.msra.mxu0 0.0
    %851 = vmatprep.subr.mxu0 0.0
    %852 = vmatpush1.msra.mxu0 0.0
    %853 = vmatprep.subr.mxu0 0.0
    %854 = vmatpush1.msra.mxu0 0.0
    %855 = vmatprep.subr.mxu0 0.0
    %856 = vmatpush1.msra.mxu0 0.0
    %857 = vmatprep.subr.mxu0 0.0
    %858 = vmatpush1.msra.mxu0 0.0
    %859 = vmatprep.subr.mxu0 0.0
    %860 = vmatpush1.msra.mxu0 0.0
    %861 = vmatprep.subr.mxu0 0.0
    %862 = vmatpush1.msra.mxu0 0.0
    %863 = vmatprep.subr.mxu0 0.0
    %864 = vmatpush1.msra.mxu0 0.0
    %865 = vmatprep.subr.mxu0 0.0
    %866 = vmatpush1.msra.mxu0 0.0
    %867 = vmatprep.subr.mxu0 0.0
    %868 = vmatpush1.msra.mxu0 0.0
    %869 = vmatprep.mubr.f32.mxu0 0.0
    %870 = vmatmul.mubr.f32.gmra.mrb[0].mxu0 %v803
    %v871 = vpop.f32.mrb[0].mxu0
    %v872 = vadd.f32 %v187, %v871
    %v873 = vpop.f32.mrb[0].mxu0
    %874 = vmatprep.mubr.f32.mxu0 0.0
    %875 = vmatmul.mubr.f32.gmra.mrb[0].mxu0 %v804
    %v876 = vpop.f32.mrb[0].mxu0
    %v877 = vadd.f32 %v187, %v876
    %v878 = vpop.f32.mrb[0].mxu0
    %879 = vdwg.mxu0
    %v880 = vmax.f32 %v872, 0.0
    %v881 = vmax.f32 %v877, 0.0
    %882 = vmatprep.subr.mxu0 0.0
    %883 = vmatpush1.msra.mxu0 %v166
    %884 = vmatprep.subr.mxu0 0.0
    %885 = vmatpush1.msra.mxu0 %v167
    %886 = vmatprep.subr.mxu0 0.0
    %887 = vmatpush1.msra.mxu0 %v168
    %888 = vmatprep.subr.mxu0 0.0
    %889 = vmatpush1.msra.mxu0 %v169
    %890 = vmatprep.subr.mxu0 0.0
    %891 = vmatpush1.msra.mxu0 %v170
    %892 = vmatprep.subr.mxu0 0.0
    %893 = vmatpush1.msra.mxu0 %v171
    %894 = vmatprep.subr.mxu0 0.0
    %895 = vmatpush1.msra.mxu0 %v172
    %896 = vmatprep.subr.mxu0 0.0
    %897 = vmatpush1.msra.mxu0 %v173
    %898 = vmatprep.subr.mxu0 0.0
    %899 = vmatpush1.msra.mxu0 %v174
    %900 = vmatprep.subr.mxu0 0.0
    %901 = vmatpush1.msra.mxu0 %v175
    %902 = vmatprep.subr.mxu0 0.0
    %903 = vmatpush1.msra.mxu0 %v176
    %904 = vmatprep.subr.mxu0 0.0
    %905 = vmatpush1.msra.mxu0 %v177
    %906 = vmatprep.subr.mxu0 0.0
    %907 = vmatpush1.msra.mxu0 %v178
    %908 = vmatprep.subr.mxu0 0.0
    %909 = vmatpush1.msra.mxu0 %v179
    %910 = vmatprep.subr.mxu0 0.0
    %911 = vmatpush1.msra.mxu0 %v180
    %912 = vmatprep.subr.mxu0 0.0
    %913 = vmatpush1.msra.mxu0 %v181
    %914 = vmatprep.subr.mxu0 0.0
    %915 = vmatpush1.msra.mxu0 0.0
    %916 = vmatprep.subr.mxu0 0.0
    %917 = vmatpush1.msra.mxu0 0.0
    %918 = vmatprep.subr.mxu0 0.0
    %919 = vmatpush1.msra.mxu0 0.0
    %920 = vmatprep.subr.mxu0 0.0
    %921 = vmatpush1.msra.mxu0 0.0
    %922 = vmatprep.subr.mxu0 0.0
    %923 = vmatpush1.msra.mxu0 0.0
    %924 = vmatprep.subr.mxu0 0.0
    %925 = vmatpush1.msra.mxu0 0.0
    %926 = vmatprep.subr.mxu0 0.0
    %927 = vmatpush1.msra.mxu0 0.0
    %928 = vmatprep.subr.mxu0 0.0
    %929 = vmatpush1.msra.mxu0 0.0
    %930 = vmatprep.subr.mxu0 0.0
    %931 = vmatpush1.msra.mxu0 0.0
    %932 = vmatprep.subr.mxu0 0.0
    %933 = vmatpush1.msra.mxu0 0.0
    %934 = vmatprep.subr.mxu0 0.0
    %935 = vmatpush1.msra.mxu0 0.0
    %936 = vmatprep.subr.mxu0 0.0
    %937 = vmatpush1.msra.mxu0 0.0
    %938 = vmatprep.subr.mxu0 0.0
    %939 = vmatpush1.msra.mxu0 0.0
    %940 = vmatprep.subr.mxu0 0.0
    %941 = vmatpush1.msra.mxu0 0.0
    %942 = vmatprep.subr.mxu0 0.0
    %943 = vmatpush1.msra.mxu0 0.0
    %944 = vmatprep.subr.mxu0 0.0
    %945 = vmatpush1.msra.mxu0 0.0
    %946 = vmatprep.mubr.f32.mxu0 0.0
    %947 = vmatmul.mubr.f32.gmra.mrb[0].mxu0 %v880
    %v948 = vpop.f32.mrb[0].mxu0
    %v949 = vadd.f32 %v187, %v948
    %v950 = vpop.f32.mrb[0].mxu0
    %951 = vmatprep.mubr.f32.mxu0 0.0
    %952 = vmatmul.mubr.f32.gmra.mrb[0].mxu0 %v881
    %v953 = vpop.f32.mrb[0].mxu0
    %v954 = vadd.f32 %v187, %v953
    %v955 = vpop.f32.mrb[0].mxu0
    %956 = vdwg.mxu0
    %v957 = vmax.f32 %v949, 0.0
    %v958 = vmax.f32 %v954, 0.0
    %v959 = vld [vmem:[%s5] sm:$0x1]
    %v961 = vlaneseq
    %v962 = vshrl.u32 %v961, 7
    %v963 = vsub.s32 0, %v962
    %v964 = vrot.slane %v959, %v963
    %v966 = vmul.f32 %v957, %v964
    %v967 = vmul.f32 %v958, %v964
    %968 = vadd.xlane.f32.xlu0 %v966
    %v969 = vpop.xlane.xlu0 %968
    %970 = vadd.xlane.f32.xlu0 %v967
    %v971 = vpop.xlane.xlu0 %970
    %v972 = vld [vmem:[#allocation2] sm:$0x1]
    %v974 = vlaneseq
    %v975 = vshrl.u32 %v974, 7
    %v976 = vsub.s32 0, %v975
    %v977 = vrot.slane %v972, %v976
    %v979 = vadd.f32 %v969, %v977
    %v980 = vadd.f32 %v971, %v977
    %vm981 = vcmask 7168
    %982 = vst.msk [vmem:[%s7] sm:$0xff] %vm981, %v979
    %983 = vst.msk [vmem:[%s7 + $0x8] sm:$0xff] %vm981, %v980
    // Predicated region
    $region42: #{tpu_custom_call.1} parent=1 // pred_check
      _
    $region43: #{tpu_custom_call.1} parent=1 // pred_check_branch
      %985 = sbr.rel (0) target = $region45
    $region44: #{tpu_custom_call.1} parent=1 // pred_region
      _
    $region45: #{tpu_custom_call.1} parent=1 // pred_fallthru
      _
    // Predicated region
    $region46: #{tpu_custom_call.1} parent=1 // pred_check
      _
    $region47: #{tpu_custom_call.1} parent=1 // pred_check_branch
      %987 = sbr.rel (0) target = $region49
    $region48: #{tpu_custom_call.1} parent=1 // pred_region
      _
    $region49: #{tpu_custom_call.1} parent=1 // pred_fallthru
      _
    %988 = vsyncpa [#allocation4], 1
    %989 = vsyncpa [#allocation6], 1

</llo_original>
